<compile_context>
chip_gen: v5e
topology: v5e:2x2
jax: 0.10.0
libtpu: 0.0.40
codegen_flags: <defaults>
</compile_context>

<pallas_src>
import jax
import jax.numpy as jnp
from jax.experimental import pallas as pl
from jax.experimental.pallas import tpu as pltpu


# -----------------------------------------------------------------------------
# Pallas kernel: fused softplus(beta=100) + dense matmul + bias add
# -----------------------------------------------------------------------------
def _decoder_kernel(x_ref, w_ref, b_ref, o_ref):
    x = x_ref[...].astype(jnp.float32)

    # PyTorch softplus(x, beta=100, threshold=20)
    beta = 100.0
    bx = x * beta
    safe_bx = jnp.minimum(bx, 20.0)          # keep the unused branch finite
    sp = jnp.where(bx > 20.0, x, jnp.log1p(jnp.exp(safe_bx)) * (1.0 / beta))

    # MXU matmul: bf16 x bf16 operands, f32 accumulation.
    y = jnp.dot(sp.astype(w_ref.dtype), w_ref[...],
                preferred_element_type=jnp.float32)
    y = y + b_ref[...].astype(jnp.float32)   # bias stays f32, added post-acc
    o_ref[...] = y.astype(o_ref.dtype)


def _round_up(a, m):
    return ((a + m - 1) // m) * m


def _softplus_linear_ref(x, w, b):
    """Pure-JAX reference (also used for the tiny N % pack tail)."""
    beta = 100.0
    bx = beta * x
    sp = jnp.where(bx > 20.0, x, jnp.log1p(jnp.exp(jnp.minimum(bx, 20.0))) / beta)
    return sp @ w.T + b


# -----------------------------------------------------------------------------
# Wrapper
# -----------------------------------------------------------------------------
def gaussian_decoder_forward(x, w, b, *, tile_rows=8192, out_dtype=None,
                             mxu_dtype=jnp.bfloat16):
    """Fused softplus(beta=100) + nn.Linear forward.

    x : (N, D) input (rows = flattened batch/points).
    w : (D, D) torch-layout nn.Linear weight (out_features, in_features).
    b : (D,)   bias.
    tile_rows : packed-row tile size (rounded to a multiple of 8).
    out_dtype : output dtype (defaults to x.dtype).
    mxu_dtype : dtype of the matmul operands inside the kernel (bf16 default).
    """
    N, D = x.shape
    assert w.shape == (D, D) and b.shape == (D,)
    out_dt = jnp.dtype(out_dtype) if out_dtype is not None else jnp.dtype(x.dtype)

    # ---- lane-dense packing: D -> 128 lanes via block-diagonal weight --------
    if D < 128 and 128 % D == 0:
        pack = 128 // D
    else:
        pack = 1
    lane = D * pack

    w_f32 = jnp.asarray(w, jnp.float32)
    b_f32 = jnp.asarray(b, jnp.float32)
    w_t = w_f32.T                                              # (D_in, D_out)
    if pack > 1:
        w_packed = jnp.kron(jnp.eye(pack, dtype=jnp.float32), w_t)   # (lane, lane)
        b_packed = jnp.tile(b_f32, pack).reshape(1, lane)
    else:
        w_packed = w_t
        b_packed = b_f32.reshape(1, lane)
    w_packed = w_packed.astype(mxu_dtype)                      # resident, tiny

    # ---- split off the <= pack-1 tail rows (no whole-array padding) ----------
    main_n = (N // pack) * pack
    M = main_n // pack                                          # packed rows

    if M == 0:
        # Degenerate tiny input: pure JAX.
        return _softplus_linear_ref(x.astype(jnp.float32), w_f32, b_f32).astype(out_dt)

    # contiguous reshape (free in HBM) -> (M, lane)
    xp = x[:main_n].reshape(M, lane) if main_n != N else x.reshape(M, lane)

    # ---- tile size: multiple of 8, amortize per-step overhead -----------------
    tr = max(8, _round_up(min(tile_rows, _round_up(M, 8)), 8))

    # Megacore: make sure the parallel grid has >= 2 steps when there is work.
    if pl.cdiv(M, tr) < 2 and M > 8:
        tr = max(8, _round_up(pl.cdiv(M, 2), 8))

    # ---- VMEM budget (generation-aware) ---------------------------------------
    try:
        vmem_cap = int(pltpu.get_tpu_info().vmem_capacity_bytes)
    except Exception:
        vmem_cap = 64 << 20                                     # conservative (v7x)
    vmem_budget = int(vmem_cap * 0.75)                          # 48 MiB on 64, 96 on 128

    x_item = jnp.dtype(x.dtype).itemsize
    o_item = out_dt.itemsize

    def _vmem_need(tr_):
        # double-buffered in + out tiles, resident weight + bias, headroom
        return (2 * tr_ * lane * (x_item + o_item)
                + lane * lane * jnp.dtype(mxu_dtype).itemsize
                + 4 * lane + (2 << 20))

    while _vmem_need(tr) > vmem_budget and tr > 8:
        tr = max(8, _round_up(tr // 2, 8))

    grid_m = pl.cdiv(M, tr)                                     # last block may be partial
    vmem_limit = int(min(max(_vmem_need(tr), 32 << 20), vmem_budget))

    cost = pl.CostEstimate(
        flops=2 * M * lane * lane,
        transcendentals=2 * M * lane,
        bytes_accessed=M * lane * (x_item + o_item)
        + lane * lane * jnp.dtype(mxu_dtype).itemsize + 4 * lane,
    )

    out_packed = pl.pallas_call(
        _decoder_kernel,
        out_shape=jax.ShapeDtypeStruct((M, lane), out_dt),
        grid_spec=pltpu.PrefetchScalarGridSpec(
            num_scalar_prefetch=0,
            grid=(grid_m,),
            in_specs=[
                pl.BlockSpec((tr, lane), lambda i: (i, 0)),      # x tile
                pl.BlockSpec((lane, lane), lambda i: (0, 0)),    # block-diag weight (bf16)
                pl.BlockSpec((1, lane), lambda i: (0, 0)),       # bias row (f32)
            ],
            out_specs=pl.BlockSpec((tr, lane), lambda i: (i, 0)),
        ),
        compiler_params=pltpu.CompilerParams(
            dimension_semantics=("parallel",),
            vmem_limit_bytes=vmem_limit,
        ),
        cost_estimate=cost,
    )(xp, w_packed, b_packed)

    out_main = out_packed.reshape(main_n, D)                    # contiguous reshape

    if main_n == N:
        return out_main

    # Tiny tail (< pack rows): pure-JAX epilogue instead of padding x in HBM.
    tail = _softplus_linear_ref(x[main_n:].astype(jnp.float32), w_f32, b_f32)
    return jnp.concatenate([out_main, tail.astype(out_dt)], axis=0)


# -----------------------------------------------------------------------------
# Deterministic parameter init mirroring the module's __init__
# -----------------------------------------------------------------------------
def init_params(key, out_channels, bias, scale):
    """W (torch layout (D_out, D_in)) with per-group xavier_uniform(gain=scale[g])
    rows and bias constant-initialized to bias[g]."""
    D = sum(out_channels)
    w = jnp.zeros((D, D), dtype=jnp.float32)
    b = jnp.zeros((D,), dtype=jnp.float32)

    start = 0
    for oc, bb, ss in zip(out_channels, bias, scale):
        key, sub = jax.random.split(key)
        fan_in, fan_out = D, oc
        bound = ss * (6.0 / (fan_in + fan_out)) ** 0.5
        rows = jax.random.uniform(sub, (oc, D), minval=-bound, maxval=bound,
                                  dtype=jnp.float32)
        w = w.at[start:start + oc, :].set(rows)
        b = b.at[start:start + oc].set(bb)
        start += oc
    return w, b


if __name__ == "__main__":
    # Module-consistent config: gaussian params grouped (sh, opacity, scale, rot) -> D = 32
    out_channels = (8, 8, 8, 8)
    bias_cfg = (0.0, -2.0, 0.0, 1.0)
    scale_cfg = (1.0, 0.05, 0.1, 1.0)
    D = sum(out_channels)

    key = jax.random.PRNGKey(0)
    kp, kx = jax.random.split(key)
    w, b = init_params(kp, out_channels, bias_cfg, scale_cfg)

    # N chosen to exercise: pack tail (203 % 4 = 3 rows), partial last grid block,
    # and the megacore >=2-step clamp (M = 50 packed rows).
    N = 203
    x = jax.random.normal(kx, (N, D), dtype=jnp.float32) * 0.5

    y = gaussian_decoder_forward(x, w, b)
    y = jax.block_until_ready(y)

    y_ref = _softplus_linear_ref(x, w, b)
    assert y.shape == (N, D)
    # bf16 MXU operands (f32 accumulation) -> loosened tolerance vs f32 reference.
    assert jnp.allclose(y, y_ref, atol=5e-2, rtol=5e-2), "mismatch vs reference"

    print("KERNEL_OK")
</pallas_src>

<mosaic_0001>
module attributes {stable_mosaic.version = 11 : i64} {
  func.func @_decoder_kernel(%arg0: i32, %arg1: memref<32x128xf32, #tpu.memory_space<vmem>>, %arg2: memref<128x128xbf16, #tpu.memory_space<vmem>>, %arg3: memref<1x128xf32, #tpu.memory_space<vmem>>, %arg4: memref<32x128xf32, #tpu.memory_space<vmem>>) attributes {dimension_semantics = [#tpu.dimension_semantics<parallel>], iteration_bounds = array<i64: 2>, scalar_prefetch = 0 : i64, scratch_operands = 0 : i64, tpu.core_type = #tpu.core_type<tc>, window_params = [{transform_indices = @transform_0, window_bounds = array<i64: 32, 128>}, {pipeline_mode = #tpu.pipeline_mode<synchronous>, transform_indices = @transform_1, window_bounds = array<i64: 128, 128>}, {pipeline_mode = #tpu.pipeline_mode<synchronous>, transform_indices = @transform_2, window_bounds = array<i64: 1, 128>}, {transform_indices = @transform_3, window_bounds = array<i64: 32, 128>}]} {
    %c0 = arith.constant 0 : index
    %c0_0 = arith.constant 0 : index
    %0 = vector.load %arg1[%c0, %c0_0] : memref<32x128xf32, #tpu.memory_space<vmem>>, vector<32x128xf32>
    %cst = arith.constant 1.000000e+02 : f32
    %1 = vector.broadcast %cst : f32 to vector<32x128xf32>
    %2 = arith.mulf %0, %1 : vector<32x128xf32>
    %cst_1 = arith.constant 2.000000e+01 : f32
    %3 = vector.broadcast %cst_1 : f32 to vector<32x128xf32>
    %4 = arith.minimumf %2, %3 : vector<32x128xf32>
    %cst_2 = arith.constant 2.000000e+01 : f32
    %5 = vector.broadcast %cst_2 : f32 to vector<32x128xf32>
    %6 = arith.cmpf ogt, %2, %5 : vector<32x128xf32>
    %7 = math.exp %4 : vector<32x128xf32>
    %8 = math.log1p %7 : vector<32x128xf32>
    %cst_3 = arith.constant 0.00999999977 : f32
    %9 = vector.broadcast %cst_3 : f32 to vector<32x128xf32>
    %10 = arith.mulf %8, %9 : vector<32x128xf32>
    %11 = arith.select %6, %0, %10 : vector<32x128xi1>, vector<32x128xf32>
    %12 = arith.truncf %11 : vector<32x128xf32> to vector<32x128xbf16>
    %c0_4 = arith.constant 0 : index
    %c0_5 = arith.constant 0 : index
    %13 = vector.load %arg2[%c0_4, %c0_5] : memref<128x128xbf16, #tpu.memory_space<vmem>>, vector<128x128xbf16>
    %cst_6 = arith.constant dense<0.000000e+00> : vector<32x128xf32>
    %14 = tpu.matmul %12, %13, %cst_6 {dimension_numbers = #tpu.dot_dimension_numbers<[1], [0], [0], [1], [0, 0, 1, 1], [], []>} : vector<32x128xbf16>, vector<128x128xbf16>, vector<32x128xf32> -> vector<32x128xf32>
    %c0_7 = arith.constant 0 : index
    %c0_8 = arith.constant 0 : index
    %15 = vector.load %arg3[%c0_7, %c0_8] : memref<1x128xf32, #tpu.memory_space<vmem>>, vector<1x128xf32>
    %16 = vector.broadcast %15 : vector<1x128xf32> to vector<32x128xf32>
    %17 = arith.addf %14, %16 : vector<32x128xf32>
    %c0_9 = arith.constant 0 : index
    %c0_10 = arith.constant 0 : index
    %18 = vector.load %arg4[%c0_9, %c0_10] : memref<32x128xf32, #tpu.memory_space<vmem>>, vector<32x128xf32>
    tpu.vector_store %arg4[%c0_9, %c0_10], %17 {strides = array<i32>} : memref<32x128xf32, #tpu.memory_space<vmem>>, vector<32x128xf32>,
    return
  }
  func.func @transform_0(%arg0: i32) -> (i32, i32) {
    %c0_i32 = arith.constant 0 : i32
    %c0_i32_0 = arith.constant 0 : i32
    return %arg0, %c0_i32 : i32, i32
  }
  func.func @transform_1(%arg0: i32) -> (i32, i32) {
    %c0_i32 = arith.constant 0 : i32
    %c0_i32_0 = arith.constant 0 : i32
    %c0_i32_1 = arith.constant 0 : i32
    return %c0_i32, %c0_i32_0 : i32, i32
  }
  func.func @transform_2(%arg0: i32) -> (i32, i32) {
    %c0_i32 = arith.constant 0 : i32
    %c0_i32_0 = arith.constant 0 : i32
    %c0_i32_1 = arith.constant 0 : i32
    return %c0_i32, %c0_i32_0 : i32, i32
  }
  func.func @transform_3(%arg0: i32) -> (i32, i32) {
    %c0_i32 = arith.constant 0 : i32
    %c0_i32_0 = arith.constant 0 : i32
    return %arg0, %c0_i32 : i32, i32
  }
}

</mosaic_0001>

<llo_original>
// kernel: tpu_custom_call.1
$region0: #{tpu_custom_call.1}
  #allocation0 [shape = 'u32[]', space=smem, size = 0x4, offset = 0x4, fixed_abs, tag = 'smem constant byte address 0x4 - core index']
  #allocation1 [shape = 'u32[72,128]{1,0:T(1,128)}', space=vmem, size = 0x9000, scoped, tag = 'internal scratch']
  %s0 = inlined_call_operand.hbm [shape: f32[50,128], index: 0, kind: input, shape index: {}]
  %s1 = inlined_call_operand.hbm [shape: bf16[128,128], index: 1, kind: input, shape index: {}]
  %s2 = inlined_call_operand.vmem [shape: f32[1,128], index: 2, kind: input, shape index: {}]
  %s3 = inlined_call_operand.hbm [shape: f32[50,128], index: 3, kind: output, shape index: {}]
  %s4 = sld [smem:[#allocation0]]
  $region53: #{tpu_custom_call.1} parent=0
    _
  %s6 = ssub.s32 1, %s4
  %s7 = scalar_select 0, %s6, %s4
  $region1: #{tpu_custom_call.1} parent=0
    #allocation2 [shape = 'u8[32768]{0}', space=vmem, size = 0x8000, scoped, tag = 'input window, operand 0']
    #allocation3 [shape = 's32[2]{0}', space=sflag, size = 0x8, scoped, tag = 'scoped memory for tpu_custom_call.1']
    #allocation4 [shape = 's32[2]{0}', space=sflag, size = 0x8, scoped, tag = 'scoped memory for tpu_custom_call.1']
    #allocation5 [shape = 'u8[32768]{0}', space=vmem, size = 0x8000, scoped, tag = 'input window, operand 1, single buffered']
    #allocation6 [shape = 's32[1]{0}', space=sflag, size = 0x4, scoped, tag = 'scoped memory for tpu_custom_call.1']
    #allocation7 [shape = 'u8[32768]{0}', space=vmem, size = 0x8000, scoped, tag = 'output window, operand 0']
    %8 = vsyncpa [#allocation3], 0
    %s9 = scalar_lea.sflag [#allocation3], 1
    %10 = vsyncpa %s9, 0
    %11 = vsyncpa [#allocation6], 0
    %12 = vsyncpa [#allocation4], 0
    %s13 = scalar_lea.sflag [#allocation4], 1
    %14 = vsyncpa %s13, 0
    loop: start=0, step=1, limit=4
    $region2: #{tpu_custom_call.1} parent=1 // loop_pre_header
      _
    $region3: #{tpu_custom_call.1} parent=1 // loop_header
      %s16 = sphi 0, %s20
      %p17 = scmp.ge.s32.totalorder %s16, 4
      %s26 = sphi 0, %s28
      %s29 = sphi 0, %s26
      %s30 = sphi 0, %s29
      %s46 = sphi 0, %s30
      %s50 = sphi 0, %s50
      %s52 = sphi 0, %s50
      %s53 = sphi 0, %s52
      %s67 = sphi 0, %s53
      %s71 = sphi 0, %s71
      %s73 = sphi 0, %s71
      %s74 = sphi 0, %s73
      %s88 = sphi 0, %s74
      %s94 = sphi 0, %s96
      %s97 = sphi 0, %s94
      %s98 = sphi 0, %s97
      %s114 = sphi 0, %s98
    $region4: #{tpu_custom_call.1} parent=1 // loop_header_branch
      %19 = sbr.rel (%p17) target = $region8
    $region5: #{tpu_custom_call.1} parent=1 // loop_body
      %s21 = ssub.s32 %s16, 1
      %s22 = ssub.s32 %s16, 2
      %s23 = sadd.s32 %s16, 1
      %s24 = ssub.s32 %s16, %s23
      %p25 = scmp.eq.s32.totalorder %s24, 0
      %s27 = sadd.s32 %s26, 1
      %s28 = scalar_select %p25, %s26, %s27
      %p31 = pneg %p25
      %p32 = scmp.eq.s32.totalorder %s16, 1
      %p33 = por %p31, %p32
      %p34 = scmp.ne.s32.totalorder %s26, %s29
      %p35 = scmp.eq.s32.totalorder %s16, 0
      %p36 = por %p34, %p35
      %p37 = scmp.ne.s32.totalorder %s26, %s29
      %p38 = scmp.eq.s32.totalorder %s21, 1
      %p39 = por %p37, %p38
      %p40 = scmp.ne.s32.totalorder %s29, %s30
      %p41 = scmp.eq.s32.totalorder %s21, 0
      %p42 = por %p40, %p41
      %p43 = scmp.ne.s32.totalorder %s29, %s30
      %p44 = scmp.eq.s32.totalorder %s22, 1
      %p45 = por %p43, %p44
      %p47 = scmp.ne.s32.totalorder %s30, %s46
      %p48 = scmp.eq.s32.totalorder %s22, 0
      %p49 = por %p47, %p48
      %s51 = sadd.s32 %s50, 1
      %p54 = scmp.eq.s32.totalorder %s16, 1
      %p55 = scmp.ne.s32.totalorder %s50, %s52
      %p56 = scmp.eq.s32.totalorder %s16, 0
      %p57 = por %p55, %p56
      %p58 = scmp.ne.s32.totalorder %s50, %s52
      %p59 = scmp.eq.s32.totalorder %s21, 1
      %p60 = por %p58, %p59
      %p61 = scmp.ne.s32.totalorder %s52, %s53
      %p62 = scmp.eq.s32.totalorder %s21, 0
      %p63 = por %p61, %p62
      %p64 = scmp.ne.s32.totalorder %s52, %s53
      %p65 = scmp.eq.s32.totalorder %s22, 1
      %p66 = por %p64, %p65
      %p68 = scmp.ne.s32.totalorder %s53, %s67
      %p69 = scmp.eq.s32.totalorder %s22, 0
      %p70 = por %p68, %p69
      %s72 = sadd.s32 %s71, 1
      %p75 = scmp.eq.s32.totalorder %s16, 1
      %p76 = scmp.ne.s32.totalorder %s71, %s73
      %p77 = scmp.eq.s32.totalorder %s16, 0
      %p78 = por %p76, %p77
      %p79 = scmp.ne.s32.totalorder %s71, %s73
      %p80 = scmp.eq.s32.totalorder %s21, 1
      %p81 = por %p79, %p80
      %p82 = scmp.ne.s32.totalorder %s73, %s74
      %p83 = scmp.eq.s32.totalorder %s21, 0
      %p84 = por %p82, %p83
      %p85 = scmp.ne.s32.totalorder %s73, %s74
      %p86 = scmp.eq.s32.totalorder %s22, 1
      %p87 = por %p85, %p86
      %p89 = scmp.ne.s32.totalorder %s74, %s88
      %p90 = scmp.eq.s32.totalorder %s22, 0
      %p91 = por %p89, %p90
      %s92 = ssub.s32 %s16, %s23
      %p93 = scmp.eq.s32.totalorder %s92, 0
      %s95 = sadd.s32 %s94, 1
      %s96 = scalar_select %p93, %s94, %s95
      %p99 = pneg %p93
      %p100 = scmp.eq.s32.totalorder %s16, 1
      %p101 = por %p99, %p100
      %p102 = scmp.ne.s32.totalorder %s94, %s97
      %p103 = scmp.eq.s32.totalorder %s16, 0
      %p104 = por %p102, %p103
      %p105 = scmp.ne.s32.totalorder %s94, %s97
      %p106 = scmp.eq.s32.totalorder %s21, 1
      %p107 = por %p105, %p106
      %p108 = scmp.ne.s32.totalorder %s97, %s98
      %p109 = scmp.eq.s32.totalorder %s21, 0
      %p110 = por %p108, %p109
      %p111 = scmp.ne.s32.totalorder %s97, %s98
      %p112 = scmp.eq.s32.totalorder %s22, 1
      %p113 = por %p111, %p112
      %p115 = scmp.ne.s32.totalorder %s98, %s114
      %p116 = scmp.eq.s32.totalorder %s22, 0
      %p117 = por %p115, %p116
      %p118 = scmp.le.s32.totalorder 1, %s16
      %p119 = scmp.lt.s32.totalorder %s16, 3
      %p120 = pnand %p118, %p119
      %p121 = pneg %p120
      // Predicated region
      $region9: #{tpu_custom_call.1} parent=5 // pred_check
        _
      $region10: #{tpu_custom_call.1} parent=5 // pred_check_branch
        %123 = sbr.rel (%p120) target = $region12
      $region11: #{tpu_custom_call.1} parent=5 // pred_region
        %s124 = ssub.s32 %s16, 1
        // Predicated region
        $region13: #{tpu_custom_call.1} parent=11 // pred_check
          %p125 = pneg %p63
        $region14: #{tpu_custom_call.1} parent=11 // pred_check_branch
          %127 = sbr.rel (%p125) target = $region16
        $region15: #{tpu_custom_call.1} parent=11 // pred_region
          %129 = vsyncadd [#allocation6], 0
          %s130 = sshll.u32 %s1, 4
          %s131 = int_to_ptr.hbm [resolvable:$true] %s130
          %s132 = sshll.u32 [#allocation5], 4
          %s133 = int_to_ptr.vmem [resolvable:$true] %s132
          %138 = dma.hbm_to_vmem [thread:$0]  %s131, 1024, %s133, [#allocation6], 64, 64, 4
        $region16: #{tpu_custom_call.1} parent=11 // pred_fallthru
          _
        // Predicated region
        $region17: #{tpu_custom_call.1} parent=11 // pred_check
          %p139 = pneg %p84
        $region18: #{tpu_custom_call.1} parent=11 // pred_check_branch
          %141 = sbr.rel (%p139) target = $region20
        $region19: #{tpu_custom_call.1} parent=11 // pred_region
          _
        $region20: #{tpu_custom_call.1} parent=11 // pred_fallthru
          _
      $region12: #{tpu_custom_call.1} parent=5 // pred_fallthru
        _
      %p142 = scmp.lt.s32.totalorder %s16, 2
      // Predicated region
      $region21: #{tpu_custom_call.1} parent=5 // pred_check
        %p143 = pneg %p142
      $region22: #{tpu_custom_call.1} parent=5 // pred_check_branch
        %145 = sbr.rel (%p143) target = $region24
      $region23: #{tpu_custom_call.1} parent=5 // pred_region
        // Predicated region
        $region25: #{tpu_custom_call.1} parent=23 // pred_check
          %p146 = pneg %p36
        $region26: #{tpu_custom_call.1} parent=23 // pred_check_branch
          %148 = sbr.rel (%p146) target = $region28
        $region27: #{tpu_custom_call.1} parent=23 // pred_region
          %s149 = sand.u32 %s26, 1
          %s150 = scalar_lea.sflag [#allocation3], %s149
          %s151 = sand.u32 %s26, 1
          %s152 = smul.addr %s151, 32
          %s153 = scalar_lea.vmem [#allocation2], %s152
          %s154 = smul.u32 4, %s16
          %s155 = ssub.s32 7, %s154
          %p156 = scmp.lt.s32.totalorder %s155, 4
          %s157 = scalar_select %p156, %s155, 4
          %s158 = smul.u32 8, %s157
          %s159 = ssub.s32 32, %s158
          %s160 = sshll.u32 %s159, 4
          %161 = vsyncadd %s150, %s160
          %p162 = scmp.ne.s32.totalorder 0, %s158
          %s163 = smul.addr %s154, 8
          %s164 = scalar_lea.hbm %s0, %s163
          %s165 = smul.u32 8, %s157
          %s166 = sshll.u32 %s164, 4
          %s167 = int_to_ptr.hbm [resolvable:$true] %s166
          %s168 = sshll.u32 %s153, 4
          %s169 = int_to_ptr.vmem [resolvable:$true] %s168
          %s170 = sshll.u32 %s165, 4
          %174 = dma.hbm_to_vmem [thread:$0]  (%p162), %s167, %s170, %s169, %s150, 128, 128, 8
        $region28: #{tpu_custom_call.1} parent=23 // pred_fallthru
          _
      $region24: #{tpu_custom_call.1} parent=5 // pred_fallthru
        _
      %p175 = scmp.le.s32.totalorder 1, %s16
      %p176 = scmp.lt.s32.totalorder %s16, 3
      %p177 = pnand %p175, %p176
      %p178 = pneg %p177
      // Predicated region
      $region29: #{tpu_custom_call.1} parent=5 // pred_check
        _
      $region30: #{tpu_custom_call.1} parent=5 // pred_check_branch
        %180 = sbr.rel (%p177) target = $region32
      $region31: #{tpu_custom_call.1} parent=5 // pred_region
        %s181 = ssub.s32 %s16, 1
        %s182 = sand.u32 %s29, 1
        %s183 = scalar_lea.sflag [#allocation3], %s182
        %s184 = sand.u32 %s29, 1
        %s185 = smul.addr %s184, 32
        %s186 = scalar_lea.vmem [#allocation2], %s185
        // Predicated region
        $region33: #{tpu_custom_call.1} parent=31 // pred_check
          %p187 = pneg %p42
        $region34: #{tpu_custom_call.1} parent=31 // pred_check_branch
          %189 = sbr.rel (%p187) target = $region36
        $region35: #{tpu_custom_call.1} parent=31 // pred_region
          %191 = dma.done %s183, 512
        $region36: #{tpu_custom_call.1} parent=31 // pred_fallthru
          _
        // Predicated region
        $region37: #{tpu_custom_call.1} parent=31 // pred_check
          %p192 = pneg %p63
        $region38: #{tpu_custom_call.1} parent=31 // pred_check_branch
          %194 = sbr.rel (%p192) target = $region40
        $region39: #{tpu_custom_call.1} parent=31 // pred_region
          %196 = dma.done [#allocation6], 1024
        $region40: #{tpu_custom_call.1} parent=31 // pred_fallthru
          _
        %s197 = sand.u32 %s29, 1
        %s198 = scalar_lea.sflag [#allocation3], %s197
        %s199 = sand.u32 %s29, 1
        %s200 = smul.addr %s199, 32
        %s201 = scalar_lea.vmem [#allocation2], %s200
        %p202 = pneg %p42
        %p203 = pneg %p39
        %p204 = pneg %p63
        %p205 = pneg %p60
        %p206 = pneg %p84
        %p207 = pneg %p81
        %p208 = pneg %p110
        %p209 = pneg %p107
        %s210 = sand.u32 %s97, 1
        %s211 = scalar_lea.sflag [#allocation4], %s210
        %s212 = sand.u32 %s97, 1
        %s213 = smul.addr %s212, 32
        %s214 = scalar_lea.vmem [#allocation7], %s213
        %s215 = smul.u32 4, %s21
        %s216 = ssub.s32 7, %s215
        %p217 = scmp.lt.s32.totalorder %s216, 4
        %s218 = scalar_select %p217, %s216, 4
        %s219 = smul.u32 8, %s218
        %s220 = smul.u32 4, %s21
        %s221 = ssub.s32 7, %s220
        %p222 = scmp.lt.s32.totalorder %s221, 4
        %s223 = scalar_select %p222, %s221, 4
        %s224 = smul.u32 8, %s223
        %v225 = vld [vmem:[%s186] sm:$0xff]
        %v226 = vld [vmem:[%s186 + $0x8] sm:$0xff]
        %v227 = vld [vmem:[%s186 + $0x10] sm:$0xff]
        %v228 = vld [vmem:[%s186 + $0x18] sm:$0xff]
        %v229 = vmul.f32 %v225, 100.0
        %v230 = vmul.f32 %v226, 100.0
        %v231 = vmul.f32 %v227, 100.0
        %v232 = vmul.f32 %v228, 100.0
        %v233 = vmin.f32 %v229, 20.0
        %v234 = vmin.f32 %v230, 20.0
        %v235 = vmin.f32 %v231, 20.0
        %v236 = vmin.f32 %v232, 20.0
        %vm237 = vcmp.gt.f32.partialorder %v229, 20.0
        %vm238 = vcmp.gt.f32.partialorder %v230, 20.0
        %vm239 = vcmp.gt.f32.partialorder %v231, 20.0
        %vm240 = vcmp.gt.f32.partialorder %v232, 20.0
        %v241 = vmul.f32 %v233, 1.442695
        %v242 = vpow.pop %v241
        %v243 = vmul.f32 %v234, 1.442695
        %v244 = vpow.pop %v243
        %v245 = vmul.f32 %v235, 1.442695
        %v246 = vpow.pop %v245
        %v247 = vmul.f32 %v236, 1.442695
        %v248 = vpow.pop %v247
        %v249 = vadd.f32 %v242, 1.0
        %v250 = vlog2.pop %v249
        %v251 = vmul.f32 %v250, 0.6931472
        %v252 = vmul.f32 -0.5, %v242
        %v253 = vadd.f32 %v252, 1.0
        %v254 = vmul.f32 %v253, %v242
        %v255 = vand.u32 2147483647, %v242
        %vm256 = vcmp.lt.f32.partialorder %v255, 0.0004427343
        %v257 = vsel %vm256, %v254, %v251
        %v258 = vadd.f32 %v244, 1.0
        %v259 = vlog2.pop %v258
        %v260 = vmul.f32 %v259, 0.6931472
        %v261 = vmul.f32 -0.5, %v244
        %v262 = vadd.f32 %v261, 1.0
        %v263 = vmul.f32 %v262, %v244
        %v264 = vand.u32 2147483647, %v244
        %vm265 = vcmp.lt.f32.partialorder %v264, 0.0004427343
        %v266 = vsel %vm265, %v263, %v260
        %v267 = vadd.f32 %v246, 1.0
        %v268 = vlog2.pop %v267
        %v269 = vmul.f32 %v268, 0.6931472
        %v270 = vmul.f32 -0.5, %v246
        %v271 = vadd.f32 %v270, 1.0
        %v272 = vmul.f32 %v271, %v246
        %v273 = vand.u32 2147483647, %v246
        %vm274 = vcmp.lt.f32.partialorder %v273, 0.0004427343
        %v275 = vsel %vm274, %v272, %v269
        %v276 = vadd.f32 %v248, 1.0
        %v277 = vlog2.pop %v276
        %v278 = vmul.f32 %v277, 0.6931472
        %v279 = vmul.f32 -0.5, %v248
        %v280 = vadd.f32 %v279, 1.0
        %v281 = vmul.f32 %v280, %v248
        %v282 = vand.u32 2147483647, %v248
        %vm283 = vcmp.lt.f32.partialorder %v282, 0.0004427343
        %v284 = vsel %vm283, %v281, %v278
        %v285 = vmul.f32 %v257, 0.01
        %v286 = vmul.f32 %v266, 0.01
        %v287 = vmul.f32 %v275, 0.01
        %v288 = vmul.f32 %v284, 0.01
        %v289 = vsel %vm237, %v225, %v285
        %v290 = vsel %vm238, %v226, %v286
        %v291 = vsel %vm239, %v227, %v287
        %v292 = vsel %vm240, %v228, %v288
        %v293 = vpack.c.bf16 %v290, %v289
        %v294 = vpack.c.bf16 %v292, %v291
        %v295 = vld [vmem:[#allocation5] sm:$0xf]
        %v296 = vld [vmem:[#allocation5 + $0x4] sm:$0xf]
        %v297 = vld [vmem:[#allocation5 + $0x8] sm:$0xf]
        %v298 = vld [vmem:[#allocation5 + $0xc] sm:$0xf]
        %v299 = vld [vmem:[#allocation5 + $0x10] sm:$0xf]
        %v300 = vld [vmem:[#allocation5 + $0x14] sm:$0xf]
        %v301 = vld [vmem:[#allocation5 + $0x18] sm:$0xf]
        %v302 = vld [vmem:[#allocation5 + $0x1c] sm:$0xf]
        %v303 = vld [vmem:[#allocation5 + $0x20] sm:$0xf]
        %v304 = vld [vmem:[#allocation5 + $0x24] sm:$0xf]
        %v305 = vld [vmem:[#allocation5 + $0x28] sm:$0xf]
        %v306 = vld [vmem:[#allocation5 + $0x2c] sm:$0xf]
        %v307 = vld [vmem:[#allocation5 + $0x30] sm:$0xf]
        %v308 = vld [vmem:[#allocation5 + $0x34] sm:$0xf]
        %v309 = vld [vmem:[#allocation5 + $0x38] sm:$0xf]
        %v310 = vld [vmem:[#allocation5 + $0x3c] sm:$0xf]
        %v311 = vld [vmem:[%s2] sm:$0x1]
        %v313 = vperm.slane %v311, 0
        %v331 = vunpack.c.l.b16 %v295
        %v332 = vunpack.c.l.b16 %v296
        %v333 = vunpack.c.l.b16 %v297
        %v334 = vunpack.c.l.b16 %v298
        %v335 = vunpack.c.l.b16 %v299
        %v336 = vunpack.c.l.b16 %v300
        %v337 = vunpack.c.l.b16 %v301
        %v338 = vunpack.c.l.b16 %v302
        %v339 = vunpack.c.l.b16 %v303
        %v340 = vunpack.c.l.b16 %v304
        %v341 = vunpack.c.l.b16 %v305
        %v342 = vunpack.c.l.b16 %v306
        %v343 = vunpack.c.l.b16 %v307
        %v344 = vunpack.c.l.b16 %v308
        %v345 = vunpack.c.l.b16 %v309
        %v346 = vunpack.c.l.b16 %v310
        %v347 = vpack.c.b16 %v332, %v331
        %v348 = vpack.c.b16 %v334, %v333
        %v349 = vpack.c.b16 %v336, %v335
        %v350 = vpack.c.b16 %v338, %v337
        %v351 = vpack.c.b16 %v340, %v339
        %v352 = vpack.c.b16 %v342, %v341
        %v353 = vpack.c.b16 %v344, %v343
        %v354 = vpack.c.b16 %v346, %v345
        %363 = vmatpush.bf16.msra.mxu0 %v354
        %364 = vmatpush.bf16.msra.mxu0 %v353
        %365 = vmatpush.bf16.msra.mxu0 %v352
        %366 = vmatpush.bf16.msra.mxu0 %v351
        %367 = vmatpush.bf16.msra.mxu0 %v350
        %368 = vmatpush.bf16.msra.mxu0 %v349
        %369 = vmatpush.bf16.msra.mxu0 %v348
        %370 = vmatpush.bf16.msra.mxu0 %v347
        %371 = vmatmul.bf16.gmra.mxu0 %v293
        %v372 = vpop.f32.mrf.mxu0
        %v373 = vadd.f32 %v313, %v372
        %v374 = vpop.f32.mrf.mxu0
        %v375 = vadd.f32 %v313, %v374
        %376 = vmatmul.bf16.gmra.mxu0 %v294
        %v377 = vpop.f32.mrf.mxu0
        %v378 = vadd.f32 %v313, %v377
        %v379 = vpop.f32.mrf.mxu0
        %v380 = vadd.f32 %v313, %v379
        %381 = vdwg.mxu0
        %382 = vst [vmem:[%s214] sm:$0xff] %v373
        %383 = vst [vmem:[%s214 + $0x8] sm:$0xff] %v375
        %384 = vst [vmem:[%s214 + $0x10] sm:$0xff] %v378
        %385 = vst [vmem:[%s214 + $0x18] sm:$0xff] %v380
        %s386 = sand.u32 %s97, 1
        %s387 = scalar_lea.sflag [#allocation4], %s386
        %s388 = sand.u32 %s97, 1
        %s389 = smul.addr %s388, 32
        %s390 = scalar_lea.vmem [#allocation7], %s389
        // Predicated region
        $region41: #{tpu_custom_call.1} parent=31 // pred_check
          %p391 = pneg %p107
        $region42: #{tpu_custom_call.1} parent=31 // pred_check_branch
          %393 = sbr.rel (%p391) target = $region44
        $region43: #{tpu_custom_call.1} parent=31 // pred_region
          %s394 = smul.u32 4, %s21
          %s395 = ssub.s32 7, %s394
          %p396 = scmp.lt.s32.totalorder %s395, 4
          %s397 = scalar_select %p396, %s395, 4
          %s398 = smul.u32 8, %s397
          %s399 = ssub.s32 32, %s398
          %s400 = sshll.u32 %s399, 4
          %401 = vsyncadd %s387, %s400
          %p402 = scmp.ne.s32.totalorder 0, %s398
          %s403 = smul.addr %s394, 8
          %s404 = scalar_lea.hbm %s3, %s403
          %s405 = smul.u32 8, %s397
          %s406 = sshll.u32 %s390, 4
          %s407 = int_to_ptr.vmem [resolvable:$true] %s406
          %s408 = sshll.u32 %s404, 4
          %s409 = int_to_ptr.hbm [resolvable:$true] %s408
          %s410 = sshll.u32 %s405, 4
          %414 = dma.vmem_to_hbm [thread:$0]  (%p402), %s407, %s410, %s409, %s387, 128, 128, 8
        $region44: #{tpu_custom_call.1} parent=31 // pred_fallthru
          _
      $region32: #{tpu_custom_call.1} parent=5 // pred_fallthru
        _
      %p415 = scmp.le.s32.totalorder 2, %s16
      // Predicated region
      $region45: #{tpu_custom_call.1} parent=5 // pred_check
        %p416 = pneg %p415
      $region46: #{tpu_custom_call.1} parent=5 // pred_check_branch
        %418 = sbr.rel (%p416) target = $region48
      $region47: #{tpu_custom_call.1} parent=5 // pred_region
        %s419 = ssub.s32 %s16, 2
        // Predicated region
        $region49: #{tpu_custom_call.1} parent=47 // pred_check
          %p420 = pneg %p113
        $region50: #{tpu_custom_call.1} parent=47 // pred_check_branch
          %422 = sbr.rel (%p420) target = $region52
        $region51: #{tpu_custom_call.1} parent=47 // pred_region
          %s423 = sand.u32 %s98, 1
          %s424 = scalar_lea.sflag [#allocation4], %s423
          %s425 = sand.u32 %s98, 1
          %s426 = smul.addr %s425, 32
          %s427 = scalar_lea.vmem [#allocation7], %s426
          %429 = dma.done %s424, 512
        $region52: #{tpu_custom_call.1} parent=47 // pred_fallthru
          _
      $region48: #{tpu_custom_call.1} parent=5 // pred_fallthru
        _
    $region6: #{tpu_custom_call.1} parent=1 // loop_footer
      %s20 = sadd.s32 1, %s16
    $region7: #{tpu_custom_call.1} parent=1 // loop_footer_branch
      %15 = sbr.rel target = $region3
    $region8: #{tpu_custom_call.1} parent=1 // loop_exit
      _
    %430 = vsyncpa [#allocation3], 1
    %s431 = scalar_lea.sflag [#allocation3], 1
    %432 = vsyncpa %s431, 1
    %433 = vsyncpa [#allocation6], 1
    %434 = vsyncpa [#allocation4], 1
    %s435 = scalar_lea.sflag [#allocation4], 1
    %436 = vsyncpa %s435, 1

</llo_original>
